<compile_context>
chip_gen: v6e
topology: v6e:2x2x1
jax: 0.10.0
libtpu: 0.0.40
codegen_flags: <defaults>
</compile_context>

<pallas_src>
import math

import jax
import jax.numpy as jnp
from jax.experimental import pallas as pl
from jax.experimental.pallas import tpu as pltpu


def _drop_path_kernel(scale_ref, x_ref, o_ref):
    # scale_ref: (TB, 128) float32, lane-replicated per-sample scale (0 or 1/keep_prob)
    # x_ref / o_ref: (TB, TF) tile of the flattened (B, F) input / output
    s = scale_ref[:, 0:1]                                  # (TB, 1) -> lane broadcast
    o_ref[...] = (x_ref[...].astype(jnp.float32) * s).astype(o_ref.dtype)


def drop_path(x, key, drop_prob: float = 0.0, training: bool = False):
    """JAX/Pallas equivalent of the PyTorch drop_path function."""
    if drop_prob == 0.0 or not training:
        return x
    if drop_prob >= 1.0:
        # keep_prob == 0: every sample is dropped (avoids 1/0 in the scale)
        return jnp.zeros_like(x)

    keep_prob = 1.0 - float(drop_prob)
    orig_shape = x.shape
    B = x.shape[0]
    F = int(math.prod(x.shape[1:])) if x.ndim > 1 else 1

    # Per-sample binary mask + 1/keep_prob scale, computed in float32 so the
    # floor threshold is never quantized by a low-precision x dtype.
    u = jax.random.uniform(key, (B,), dtype=jnp.float32)
    scale = jnp.floor(keep_prob + u) * (1.0 / keep_prob)        # (B,): 0.0 or 1/keep_prob
    scale_tile = jnp.broadcast_to(scale[:, None], (B, 128))     # lane-replicated, tiny

    # Flatten trailing dims; pad the feature axis to a multiple of 128 only if
    # required (ViT D=768/1024 never needs it) to keep stores lane-dense.
    LANE = 128
    x2 = x.reshape(B, F)
    F_pad = ((F + LANE - 1) // LANE) * LANE
    if F_pad != F:
        x2 = jnp.pad(x2, ((0, 0), (0, F_pad - F)))

    # Tile sizing: ~2 MiB per x tile.
    itemsize = jnp.dtype(x.dtype).itemsize
    sub = max(8, 32 // itemsize)                    # sublane multiple for this dtype
    target_elems = (2 * 1024 * 1024) // itemsize    # ~2 MiB worth of elements

    TF = min(F_pad, max(LANE, ((target_elems // sub) // LANE) * LANE))
    rows = max(1, target_elems // TF)
    if B <= rows:
        TB = B                                      # full-dim block: always legal
    else:
        TB = max(sub, (rows // sub) * sub)          # keep second-minor a multiple of sub

    grid = (pl.cdiv(B, TB), pl.cdiv(F_pad, TF))

    out = pl.pallas_call(
        _drop_path_kernel,
        out_shape=jax.ShapeDtypeStruct((B, F_pad), x.dtype),
        grid=grid,
        in_specs=[
            pl.BlockSpec((TB, 128), lambda i, j: (i, 0)),   # per-sample scale
            pl.BlockSpec((TB, TF), lambda i, j: (i, j)),    # x tile
        ],
        out_specs=pl.BlockSpec((TB, TF), lambda i, j: (i, j)),
        compiler_params=pltpu.CompilerParams(
            dimension_semantics=("parallel", "parallel")),
    )(scale_tile, x2)

    if F_pad != F:
        out = out[:, :F]
    return out.reshape(orig_shape)


class DropPath:
    """Drop paths (Stochastic Depth) per sample."""

    def __init__(self, drop_prob=None):
        self.drop_prob = drop_prob
        self.training = True

    def __call__(self, x, key):
        p = 0.0 if self.drop_prob is None else self.drop_prob
        return drop_path(x, key, p, self.training)


if __name__ == "__main__":
    key = jax.random.PRNGKey(0)
    k_x, k_drop, k_x2 = jax.random.split(key, 3)

    # --- small ViT-like f32 tensor ----------------------------------------
    B, N, D = 2, 8, 32
    x = jax.random.normal(k_x, (B, N, D), dtype=jnp.float32)
    mod = DropPath(drop_prob=0.25)

    out = jax.block_until_ready(mod(x, k_drop))
    assert out.shape == x.shape and out.dtype == x.dtype

    keep_prob = 0.75
    rand = jax.random.uniform(k_drop, (B,), dtype=jnp.float32)
    mask = jnp.floor(keep_prob + rand).reshape(B, 1, 1)
    ref = x / keep_prob * mask
    assert jnp.allclose(out, ref, rtol=1e-5, atol=1e-6), "drop_path kernel mismatch vs reference"

    # --- bf16 input: threshold math stays in float32 -----------------------
    xb = jax.random.normal(k_x2, (4, 8, 128), dtype=jnp.bfloat16)
    out_b = jax.block_until_ready(drop_path(xb, k_drop, 0.25, True))
    rand_b = jax.random.uniform(k_drop, (4,), dtype=jnp.float32)
    mask_b = jnp.floor(keep_prob + rand_b).reshape(4, 1, 1)
    ref_b = (xb.astype(jnp.float32) / keep_prob * mask_b).astype(jnp.bfloat16)
    assert jnp.allclose(out_b.astype(jnp.float32), ref_b.astype(jnp.float32),
                        rtol=1e-2, atol=1e-2), "bf16 drop_path mismatch"

    # --- drop_prob >= 1.0: everything dropped -------------------------------
    out_all = jax.block_until_ready(drop_path(x, k_drop, 1.0, True))
    assert jnp.array_equal(out_all, jnp.zeros_like(x)), "p=1 drop_path must be zeros"

    # --- eval mode (or drop_prob == 0): identity passthrough ----------------
    mod.training = False
    out_eval = jax.block_until_ready(mod(x, k_drop))
    assert jnp.array_equal(out_eval, x), "eval-mode drop_path must be identity"

    print("KERNEL_OK")
</pallas_src>

<mosaic_0001>
module attributes {stable_mosaic.version = 11 : i64} {
  func.func @_drop_path_kernel(%arg0: i32, %arg1: i32, %arg2: memref<2x128xf32, #tpu.memory_space<vmem>>, %arg3: memref<2x256xf32, #tpu.memory_space<vmem>>, %arg4: memref<2x256xf32, #tpu.memory_space<vmem>>) attributes {dimension_semantics = [#tpu.dimension_semantics<parallel>, #tpu.dimension_semantics<parallel>], iteration_bounds = array<i64: 1, 1>, scalar_prefetch = 0 : i64, scratch_operands = 0 : i64, tpu.core_type = #tpu.core_type<tc>, window_params = [{transform_indices = @transform_0, window_bounds = array<i64: 2, 128>}, {transform_indices = @transform_1, window_bounds = array<i64: 2, 256>}, {transform_indices = @transform_2, window_bounds = array<i64: 2, 256>}]} {
    %c0 = arith.constant 0 : index
    %c0_0 = arith.constant 0 : index
    %0 = vector.load %arg2[%c0, %c0_0] : memref<2x128xf32, #tpu.memory_space<vmem>>, vector<2x1xf32>
    %c0_1 = arith.constant 0 : index
    %c0_2 = arith.constant 0 : index
    %1 = vector.load %arg3[%c0_1, %c0_2] : memref<2x256xf32, #tpu.memory_space<vmem>>, vector<2x256xf32>
    %2 = vector.broadcast %0 : vector<2x1xf32> to vector<2x256xf32>
    %3 = arith.mulf %1, %2 : vector<2x256xf32>
    %c0_3 = arith.constant 0 : index
    %c0_4 = arith.constant 0 : index
    %4 = vector.load %arg4[%c0_3, %c0_4] : memref<2x256xf32, #tpu.memory_space<vmem>>, vector<2x256xf32>
    tpu.vector_store %arg4[%c0_3, %c0_4], %3 {strides = array<i32>} : memref<2x256xf32, #tpu.memory_space<vmem>>, vector<2x256xf32>,
    return
  }
  func.func @transform_0(%arg0: i32, %arg1: i32) -> (i32, i32) {
    %c0_i32 = arith.constant 0 : i32
    %c0_i32_0 = arith.constant 0 : i32
    return %arg0, %c0_i32 : i32, i32
  }
  func.func @transform_1(%arg0: i32, %arg1: i32) -> (i32, i32) {
    %c0_i32 = arith.constant 0 : i32
    return %arg0, %arg1 : i32, i32
  }
  func.func @transform_2(%arg0: i32, %arg1: i32) -> (i32, i32) {
    %c0_i32 = arith.constant 0 : i32
    return %arg0, %arg1 : i32, i32
  }
}

</mosaic_0001>

<llo_original>
// kernel: tpu_custom_call.1
$region0: #{tpu_custom_call.1}
  #allocation0 [shape = 'u32[]', space=smem, size = 0x4, offset = 0x4, fixed_abs, tag = 'smem constant byte address 0x4 - core index']
  #allocation1 [shape = 'u32[144,128]{1,0:T(1,128)}', space=vmem, size = 0x12000, scoped, tag = 'internal scratch']
  %s0 = inlined_call_operand.hbm [shape: f32[2,128], index: 0, kind: input, shape index: {}]
  %s1 = inlined_call_operand.hbm [shape: f32[2,256], index: 1, kind: input, shape index: {}]
  %s2 = inlined_call_operand.hbm [shape: f32[2,256], index: 2, kind: output, shape index: {}]
  %s3 = sld [smem:[#allocation0]]
  $region26: #{tpu_custom_call.1} parent=0
    _
  %s5 = ssub.s32 1, %s3
  %s6 = scalar_select 0, %s5, %s3
  $region1: #{tpu_custom_call.1} parent=0
    #allocation2 [shape = 'u8[1024]{0}', space=vmem, size = 0x400, scoped, tag = 'input window, operand 0, single buffered']
    #allocation3 [shape = 's32[1]{0}', space=sflag, size = 0x4, scoped, tag = 'scoped memory for tpu_custom_call.1']
    #allocation4 [shape = 's32[1]{0}', space=sflag, size = 0x4, scoped, tag = 'scoped memory for tpu_custom_call.1']
    #allocation5 [shape = 'u8[2048]{0}', space=vmem, size = 0x800, scoped, tag = 'input window, operand 1, single buffered']
    #allocation6 [shape = 's32[1]{0}', space=sflag, size = 0x4, scoped, tag = 'scoped memory for tpu_custom_call.1']
    #allocation7 [shape = 'u8[2048]{0}', space=vmem, size = 0x800, scoped, tag = 'output window, operand 0, single buffered']
    %7 = vsyncpa [#allocation3], 0
    %8 = vsyncpa [#allocation6], 0
    %9 = vsyncpa [#allocation4], 0
    // Predicated region
    $region2: #{tpu_custom_call.1} parent=1 // pred_check
      _
    $region3: #{tpu_custom_call.1} parent=1 // pred_check_branch
      %11 = sbr.rel (0) target = $region5
    $region4: #{tpu_custom_call.1} parent=1 // pred_region
      %s13 = ssub.s32 32, 32
      %14 = vsyncadd [#allocation3], %s13
      %s16 = sshll.u32 [#allocation2], 4
      %s17 = int_to_ptr.vmem [resolvable:$true] %s16
      %19 = dma.hbm_to_vmem [thread:$0]  %s0, 32, %s17, [#allocation3]
    $region5: #{tpu_custom_call.1} parent=1 // pred_fallthru
      _
    // Predicated region
    $region6: #{tpu_custom_call.1} parent=1 // pred_check
      _
    $region7: #{tpu_custom_call.1} parent=1 // pred_check_branch
      %21 = sbr.rel (0) target = $region9
    $region8: #{tpu_custom_call.1} parent=1 // pred_region
      %s23 = ssub.s32 64, 64
      %24 = vsyncadd [#allocation6], %s23
      %s26 = sshll.u32 [#allocation5], 4
      %s27 = int_to_ptr.vmem [resolvable:$true] %s26
      %29 = dma.hbm_to_vmem [thread:$0]  %s1, 64, %s27, [#allocation6]
    $region9: #{tpu_custom_call.1} parent=1 // pred_fallthru
      _
    // Predicated region
    $region10: #{tpu_custom_call.1} parent=1 // pred_check
      _
    $region11: #{tpu_custom_call.1} parent=1 // pred_check_branch
      %31 = sbr.rel (0) target = $region13
    $region12: #{tpu_custom_call.1} parent=1 // pred_region
      %32 = dma.done [#allocation3], 32
    $region13: #{tpu_custom_call.1} parent=1 // pred_fallthru
      _
    // Predicated region
    $region14: #{tpu_custom_call.1} parent=1 // pred_check
      _
    $region15: #{tpu_custom_call.1} parent=1 // pred_check_branch
      %34 = sbr.rel (0) target = $region17
    $region16: #{tpu_custom_call.1} parent=1 // pred_region
      %35 = dma.done [#allocation6], 64
    $region17: #{tpu_custom_call.1} parent=1 // pred_fallthru
      _
    %v36 = vld [vmem:[#allocation2] sm:$0x3]
    %v37 = vld [vmem:[#allocation5] sm:$0xf]
    %39 = vset.pattern.permute.xlu0 0
    %40 = vperm.xlu0 %39, %v36
    %v41 = vpop.permute.xlu0 %40
    %v43 = vunpack.c.l.s4 269488144
    %v44 = vunpack.c.0.s8 %v43
    %v45 = vlaneseq
    %v46 = vshrl.u32 %v45, 7
    %v47 = vsub.s32 %v44, %v46
    %v48 = vrot.slane %v41, %v47
    %v50 = vmul.f32 %v37, %v48
    %51 = vst [vmem:[#allocation7] sm:$0xf] %v50
    // Predicated region
    $region18: #{tpu_custom_call.1} parent=1 // pred_check
      _
    $region19: #{tpu_custom_call.1} parent=1 // pred_check_branch
      %53 = sbr.rel (0) target = $region21
    $region20: #{tpu_custom_call.1} parent=1 // pred_region
      %s55 = ssub.s32 64, 64
      %56 = vsyncadd [#allocation4], %s55
      %s58 = sshll.u32 [#allocation7], 4
      %s59 = int_to_ptr.vmem [resolvable:$true] %s58
      %61 = dma.vmem_to_hbm [thread:$0]  %s59, 64, %s2, [#allocation4]
    $region21: #{tpu_custom_call.1} parent=1 // pred_fallthru
      _
    // Predicated region
    $region22: #{tpu_custom_call.1} parent=1 // pred_check
      _
    $region23: #{tpu_custom_call.1} parent=1 // pred_check_branch
      %63 = sbr.rel (0) target = $region25
    $region24: #{tpu_custom_call.1} parent=1 // pred_region
      %64 = dma.done [#allocation4], 64
    $region25: #{tpu_custom_call.1} parent=1 // pred_fallthru
      _
    %65 = vsyncpa [#allocation3], 1
    %66 = vsyncpa [#allocation6], 1
    %67 = vsyncpa [#allocation4], 1

</llo_original>
